<compile_context>
chip_gen: v5e
topology: v5e:2x2
jax: 0.10.0
libtpu: 0.0.40
codegen_flags: <defaults>
</compile_context>

<pallas_src>
import functools

import jax
import jax.numpy as jnp
from jax.experimental import pallas as pl
from jax.experimental.pallas import tpu as pltpu


_TM_MAX = 512                 # row tile cap (multiple of 16)
_TN_MAX = 512                 # output-channel tile cap (multiple of 128 when tiled)
_VMEM_LIMIT = 32 * 1024 * 1024


def _cdiv(a, b):
    return (a + b - 1) // b


def _round_up(x, m):
    return _cdiv(x, m) * m


def _choose_n(n):
    """(padded N, TN): full-dim block when small, 128-multiple tiling otherwise."""
    if n <= _TN_MAX:
        return n, n
    npad = _round_up(n, 128)
    tn = _TN_MAX
    while npad % tn:
        tn -= 128
    return npad, tn


def _choose_m(m, n_tiles, tm_min=16):
    """(padded M, TM): TM multiple of 16; >=2 grid blocks when possible (v7x megacore)."""
    tm_min = _round_up(max(tm_min, 16), 16)
    tm = max(min(_TM_MAX, _round_up(m, 16)), tm_min)
    if n_tiles * _cdiv(m, tm) < 2 and m > tm_min:
        tm = max(_round_up(_cdiv(m, 2), 16), tm_min)
    return _round_up(m, tm), tm


def _compiler_params():
    return pltpu.CompilerParams(
        dimension_semantics=("parallel", "parallel"),
        vmem_limit_bytes=_VMEM_LIMIT)


# ---------------------------------------------------------------------------
# Kernels
# ---------------------------------------------------------------------------
def _conv1x1_dual_kernel(x_ref, w1_ref, b1_ref, w2_ref, b2_ref, o1_ref, o2_ref):
    """Fused conv1(+bn1+relu) and downsample(+bn) sharing one LHS tile."""
    x = x_ref[...]
    y1 = jnp.dot(x, w1_ref[...], preferred_element_type=jnp.float32) + b1_ref[...]
    o1_ref[...] = jnp.maximum(y1, 0.0).astype(o1_ref.dtype)
    y2 = jnp.dot(x, w2_ref[...], preferred_element_type=jnp.float32) + b2_ref[...]
    o2_ref[...] = y2.astype(o2_ref.dtype)


def _conv1x1_kernel(x_ref, w_ref, b_ref, o_ref, *, relu):
    y = jnp.dot(x_ref[...], w_ref[...], preferred_element_type=jnp.float32) + b_ref[...]
    if relu:
        y = jnp.maximum(y, 0.0)
    o_ref[...] = y.astype(o_ref.dtype)


def _conv3x3_res_kernel(a_ref, b_ref, w_ref, sh_ref, r_ref, o_ref, xcat_ref, *, offsets):
    """3x3 conv as 9 shift-and-accumulate matmuls + bn2 shift + residual + ReLU.

    a_ref = row block i, b_ref = row block i+1 (halo); both blocks are stitched
    into the VMEM scratch and sliced per tap (no im2col in HBM).
    """
    tm = a_ref.shape[0]
    xcat_ref[pl.ds(0, tm), :] = a_ref[...]
    xcat_ref[pl.ds(tm, tm), :] = b_ref[...]
    acc = jnp.zeros(o_ref.shape, jnp.float32)
    for t, off in enumerate(offsets):           # 9 static taps, unrolled
        acc = acc + jnp.dot(xcat_ref[pl.ds(off, tm), :], w_ref[t],
                            preferred_element_type=jnp.float32)
    out = acc + sh_ref[...] + r_ref[...].astype(jnp.float32)
    o_ref[...] = jnp.maximum(out, 0.0).astype(o_ref.dtype)


# ---------------------------------------------------------------------------
# pallas_call wrappers
# ---------------------------------------------------------------------------
def conv1x1_dual(x, p1, p2, mp, tm):
    """Fused (conv1+bn1+relu, downsample+bn); bf16 outputs of shape (mp, Np)."""
    _, cin = x.shape
    npad, tn = p1["Np"], p1["TN"]
    grid = (mp // tm, npad // tn)
    flops = 2 * (2 * mp * npad * cin)
    bytes_acc = mp * cin * 2 + 2 * cin * npad * 2 + 2 * mp * npad * 2
    return pl.pallas_call(
        _conv1x1_dual_kernel,
        out_shape=(jax.ShapeDtypeStruct((mp, npad), jnp.bfloat16),
                   jax.ShapeDtypeStruct((mp, npad), jnp.bfloat16)),
        grid=grid,
        in_specs=[pl.BlockSpec((tm, cin), lambda i, j: (i, 0)),
                  pl.BlockSpec((cin, tn), lambda i, j: (0, j)),
                  pl.BlockSpec((1, tn), lambda i, j: (0, j)),
                  pl.BlockSpec((cin, tn), lambda i, j: (0, j)),
                  pl.BlockSpec((1, tn), lambda i, j: (0, j))],
        out_specs=(pl.BlockSpec((tm, tn), lambda i, j: (i, j)),
                   pl.BlockSpec((tm, tn), lambda i, j: (i, j))),
        compiler_params=_compiler_params(),
        cost_estimate=pl.CostEstimate(flops=flops, transcendentals=0,
                                      bytes_accessed=bytes_acc),
    )(x, p1["w"], p1["shift"], p2["w"], p2["shift"])


def conv1x1(x, pk, mp, tm, relu):
    _, cin = x.shape
    npad, tn = pk["Np"], pk["TN"]
    grid = (mp // tm, npad // tn)
    return pl.pallas_call(
        functools.partial(_conv1x1_kernel, relu=relu),
        out_shape=jax.ShapeDtypeStruct((mp, npad), jnp.bfloat16),
        grid=grid,
        in_specs=[pl.BlockSpec((tm, cin), lambda i, j: (i, 0)),
                  pl.BlockSpec((cin, tn), lambda i, j: (0, j)),
                  pl.BlockSpec((1, tn), lambda i, j: (0, j))],
        out_specs=pl.BlockSpec((tm, tn), lambda i, j: (i, j)),
        compiler_params=_compiler_params(),
        cost_estimate=pl.CostEstimate(
            flops=2 * mp * npad * cin, transcendentals=0,
            bytes_accessed=mp * cin * 2 + cin * npad * 2 + mp * npad * 2),
    )(x, pk["w"], pk["shift"])


def conv3x3_res(a, pk, res, mp, tm, offsets):
    """a: (mp + tm, C) bf16 padded activation rows; res: (mp, Np) bf16 residual."""
    _, c = a.shape
    npad, tn = pk["Np"], pk["TN"]
    grid = (mp // tm, npad // tn)
    flops = 2 * mp * npad * 9 * c
    bytes_acc = 2 * mp * c * 2 + 9 * c * npad * 2 + mp * npad * (2 + 4)
    return pl.pallas_call(
        functools.partial(_conv3x3_res_kernel, offsets=offsets),
        out_shape=jax.ShapeDtypeStruct((mp, npad), jnp.float32),
        grid=grid,
        in_specs=[pl.BlockSpec((tm, c), lambda i, j: (i, 0)),      # rows block i
                  pl.BlockSpec((tm, c), lambda i, j: (i + 1, 0)),  # rows block i+1 (halo)
                  pl.BlockSpec((9, c, tn), lambda i, j: (0, 0, j)),
                  pl.BlockSpec((1, tn), lambda i, j: (0, j)),
                  pl.BlockSpec((tm, tn), lambda i, j: (i, j))],
        out_specs=pl.BlockSpec((tm, tn), lambda i, j: (i, j)),
        scratch_shapes=[pltpu.VMEM((2 * tm, c), jnp.bfloat16)],
        compiler_params=_compiler_params(),
        cost_estimate=pl.CostEstimate(flops=flops, transcendentals=0,
                                      bytes_accessed=bytes_acc),
    )(a, a, pk["w"], pk["shift"], res)


# ---------------------------------------------------------------------------
# Parameter construction (deterministic, synthetic; BN folded + pre-packed)
# ---------------------------------------------------------------------------
class _KeyGen:
    def __init__(self, key):
        self.key = key

    def next(self):
        self.key, k = jax.random.split(self.key)
        return k


def _conv_w(kg, kh, kw, cin, cout):
    fan_in = kh * kw * cin
    return (jax.random.normal(kg.next(), (kh, kw, cin, cout), jnp.float32)
            * (1.0 / jnp.sqrt(fan_in)))


def _bn_fold(kg, c, eps=1e-5):
    gamma = jax.random.uniform(kg.next(), (c,), jnp.float32, 0.5, 1.5)
    beta = jax.random.normal(kg.next(), (c,), jnp.float32) * 0.1
    mean = jax.random.normal(kg.next(), (c,), jnp.float32) * 0.1
    var = jax.random.uniform(kg.next(), (c,), jnp.float32, 0.5, 1.5)
    scale = gamma / jnp.sqrt(var + eps)
    shift = beta - mean * scale
    return scale, shift


def _pack_1x1(w, scale, shift):
    """Fold BN scale into the weight, cast bf16, pad N once at init time."""
    _, _, cin, cout = w.shape
    npad, tn = _choose_n(cout)
    wf = w.reshape(cin, cout) * scale[None, :]
    wp = jnp.pad(wf, ((0, 0), (0, npad - cout))).astype(jnp.bfloat16)
    sp = jnp.pad(shift, (0, npad - cout)).reshape(1, npad).astype(jnp.float32)
    return {"w": wp, "shift": sp, "N": cout, "Np": npad, "TN": tn,
            "w_raw": w, "scale_raw": scale, "shift_raw": shift}


def _pack_3x3(w, scale, shift):
    kh, kw, cin, cout = w.shape
    npad, tn = _choose_n(cout)
    wf = (w * scale[None, None, None, :]).reshape(kh * kw, cin, cout)
    wp = jnp.pad(wf, ((0, 0), (0, 0), (0, npad - cout))).astype(jnp.bfloat16)
    sp = jnp.pad(shift, (0, npad - cout)).reshape(1, npad).astype(jnp.float32)
    return {"w": wp, "shift": sp, "N": cout, "Np": npad, "TN": tn, "C": cin,
            "w_raw": w, "scale_raw": scale, "shift_raw": shift}


def init_bottleneck_params(key, in_channel, out_channel, stride=1,
                           expansion=1, with_downsample=True):
    # TODO(synk): the reference builds bn2 with out_channel*expansion features,
    # which is only shape-consistent with conv2's out_channel output when
    # expansion == 1 (PyTorch raises otherwise); we keep that same constraint.
    assert expansion == 1, "reference forward only runs with expansion == 1"
    kg = _KeyGen(key)
    p = {
        "stride": stride,
        # conv1: 1x1, stride=stride, padding=1, bias=False   + bn1
        "conv1": _pack_1x1(_conv_w(kg, 1, 1, in_channel, out_channel),
                           *_bn_fold(kg, out_channel)),
        # conv2: 3x3, stride=1, padding=1, bias=False        + bn2
        "conv2": _pack_3x3(_conv_w(kg, 3, 3, out_channel, out_channel),
                           *_bn_fold(kg, out_channel * expansion)),
        "downsample": None,
    }
    if with_downsample:
        # downsample maps x to conv2's output shape: 1x1 conv with the same
        # stride AND padding=1 (mirrors conv1's spatial growth) + BN.
        p["downsample"] = _pack_1x1(_conv_w(kg, 1, 1, in_channel, out_channel),
                                    *_bn_fold(kg, out_channel))
    return p


# ---------------------------------------------------------------------------
# Forward pass (matches the PyTorch Bottleneck.forward, inference mode)
# ---------------------------------------------------------------------------
def bottleneck_forward(x_nchw, p):
    # NCHW -> NHWC only at the block interface (hoist when chaining blocks).
    x = jnp.transpose(x_nchw, (0, 2, 3, 1)).astype(jnp.float32)
    s = p["stride"]
    c1, c2, ds = p["conv1"], p["conv2"], p["downsample"]
    cout, np1, tn1 = c1["N"], c1["Np"], c1["TN"]

    # Shared 1x1 "im2col" for conv1 / downsample: zero pad=1, stride-s subsample.
    xpad = jnp.pad(x.astype(jnp.bfloat16), ((0, 0), (1, 1), (1, 1), (0, 0)))
    xs = xpad[:, ::s, ::s, :]
    n, h1, w1, cin = xs.shape
    m1 = n * h1 * w1
    mp1, tm1 = _choose_m(m1, np1 // tn1)
    # TODO(synk): in-kernel remainder masking would remove this small M pad
    # and the [:m1] slices below.
    x1 = jnp.pad(xs.reshape(m1, cin), ((0, mp1 - m1), (0, 0)))

    if ds is not None:
        assert ds["Np"] == np1 and ds["TN"] == tn1
        y1p, rsp = conv1x1_dual(x1, c1, ds, mp1, tm1)
        res = rsp[:m1, :cout].reshape(n, h1, w1, cout)
    else:
        y1p = conv1x1(x1, c1, mp1, tm1, relu=True)
        res = x  # identity
    y1 = y1p[:m1, :cout].reshape(n, h1, w1, cout)
    if res.shape != y1.shape:
        raise ValueError("residual shape mismatch: a matching downsample is "
                         "required for this configuration")

    # conv2 (3x3, stride 1, pad 1) as 9 shift-and-accumulate matmuls over the
    # once-padded activation (no 9x im2col patch materialization).
    hp2, wp2 = h1 + 2, w1 + 2
    mext = n * hp2 * wp2                       # rows of the "extended" output grid
    np2, tn2 = c2["Np"], c2["TN"]
    mp2, tm2 = _choose_m(mext, np2 // tn2, tm_min=2 * wp2 + 2)   # halo fits 2 blocks
    a = jnp.pad(y1, ((0, 0), (1, 1), (1, 1), (0, 0))).reshape(mext, cout)
    a = jnp.pad(a, ((0, mp2 + tm2 - mext), (0, 0)))   # + one tile of rows for halo reads
    # residual placed at the valid extended rows (top-left anchored), zero elsewhere
    r = jnp.pad(res.astype(jnp.bfloat16),
                ((0, 0), (0, hp2 - h1), (0, wp2 - w1),
                 (0, np2 - cout))).reshape(mext, np2)
    r = jnp.pad(r, ((0, mp2 - mext), (0, 0)))
    offsets = tuple(dy * wp2 + dx for dy in range(3) for dx in range(3))

    out = conv3x3_res(a, c2, r, mp2, tm2, offsets)            # (mp2, np2) f32
    out = out[:mext, :c2["N"]].reshape(n, hp2, wp2, c2["N"])[:, :h1, :w1, :]
    return jnp.transpose(out, (0, 3, 1, 2))                   # NHWC -> NCHW


# ---------------------------------------------------------------------------
# Pure-XLA reference (for a numerical sanity check only)
# ---------------------------------------------------------------------------
def _ref_conv_bn(x, w, scale, shift, stride, pad, relu):
    y = jax.lax.conv_general_dilated(
        x, w, window_strides=(stride, stride),
        padding=((pad, pad), (pad, pad)),
        dimension_numbers=("NHWC", "HWIO", "NHWC"))
    y = y * scale + shift
    return jnp.maximum(y, 0.0) if relu else y


def ref_bottleneck_forward(x_nchw, p):
    x = jnp.transpose(x_nchw, (0, 2, 3, 1)).astype(jnp.float32)
    s = p["stride"]
    c1, c2 = p["conv1"], p["conv2"]
    out = _ref_conv_bn(x, c1["w_raw"], c1["scale_raw"], c1["shift_raw"],
                       s, 1, True)
    if p["downsample"] is not None:
        d = p["downsample"]
        identity = _ref_conv_bn(x, d["w_raw"], d["scale_raw"], d["shift_raw"],
                                s, 1, False)
    else:
        identity = x
    out = _ref_conv_bn(out, c2["w_raw"], c2["scale_raw"], c2["shift_raw"],
                       1, 1, False)
    out = jnp.maximum(out + identity, 0.0)
    return jnp.transpose(out, (0, 3, 1, 2))


# ---------------------------------------------------------------------------
if __name__ == "__main__":
    key = jax.random.PRNGKey(0)
    pkey, xkey = jax.random.split(key)

    # Small shapes consistent with the module: NCHW input, 4 -> 8 channels.
    in_c, out_c, stride = 4, 8, 2
    params = init_bottleneck_params(pkey, in_c, out_c, stride=stride,
                                    expansion=1, with_downsample=True)
    x = jax.random.normal(xkey, (2, in_c, 16, 16), jnp.float32)

    y = jax.block_until_ready(bottleneck_forward(x, params))

    # conv1 (1x1, padding=1, stride=2) maps 16x16 -> 9x9 spatial.
    assert y.shape == (2, out_c, 9, 9), y.shape
    assert bool(jnp.all(jnp.isfinite(y)))

    # Numerical sanity check against a pure-XLA f32 reference (bf16 MXU tol).
    y_ref = ref_bottleneck_forward(x, params)
    assert bool(jnp.allclose(y, y_ref, atol=1e-1, rtol=1e-1)), (
        float(jnp.max(jnp.abs(y - y_ref))))

    print("KERNEL_OK")
</pallas_src>

<mosaic_0001>
module attributes {stable_mosaic.version = 11 : i64} {
  func.func @_conv1x1_dual_kernel(%arg0: i32, %arg1: i32, %arg2: memref<96x4xbf16, #tpu.memory_space<vmem>>, %arg3: memref<4x8xbf16, #tpu.memory_space<vmem>>, %arg4: memref<1x8xf32, #tpu.memory_space<vmem>>, %arg5: memref<4x8xbf16, #tpu.memory_space<vmem>>, %arg6: memref<1x8xf32, #tpu.memory_space<vmem>>, %arg7: memref<96x8xbf16, #tpu.memory_space<vmem>>, %arg8: memref<96x8xbf16, #tpu.memory_space<vmem>>) attributes {dimension_semantics = [#tpu.dimension_semantics<parallel>, #tpu.dimension_semantics<parallel>], iteration_bounds = array<i64: 2, 1>, scalar_prefetch = 0 : i64, scratch_operands = 0 : i64, tpu.core_type = #tpu.core_type<tc>, window_params = [{transform_indices = @transform_0, window_bounds = array<i64: 96, 4>}, {transform_indices = @transform_1, window_bounds = array<i64: 4, 8>}, {transform_indices = @transform_2, window_bounds = array<i64: 1, 8>}, {transform_indices = @transform_3, window_bounds = array<i64: 4, 8>}, {transform_indices = @transform_4, window_bounds = array<i64: 1, 8>}, {transform_indices = @transform_5, window_bounds = array<i64: 96, 8>}, {transform_indices = @transform_6, window_bounds = array<i64: 96, 8>}]} {
    %c0 = arith.constant 0 : index
    %c0_0 = arith.constant 0 : index
    %0 = vector.load %arg2[%c0, %c0_0] : memref<96x4xbf16, #tpu.memory_space<vmem>>, vector<96x4xbf16>
    %c0_1 = arith.constant 0 : index
    %c0_2 = arith.constant 0 : index
    %1 = vector.load %arg3[%c0_1, %c0_2] : memref<4x8xbf16, #tpu.memory_space<vmem>>, vector<4x8xbf16>
    %cst = arith.constant dense<0.000000e+00> : vector<96x8xf32>
    %2 = tpu.matmul %0, %1, %cst {dimension_numbers = #tpu.dot_dimension_numbers<[1], [0], [0], [1], [0, 0, 1, 1], [], []>} : vector<96x4xbf16>, vector<4x8xbf16>, vector<96x8xf32> -> vector<96x8xf32>
    %c0_3 = arith.constant 0 : index
    %c0_4 = arith.constant 0 : index
    %3 = vector.load %arg4[%c0_3, %c0_4] : memref<1x8xf32, #tpu.memory_space<vmem>>, vector<1x8xf32>
    %4 = vector.broadcast %3 : vector<1x8xf32> to vector<96x8xf32>
    %5 = arith.addf %2, %4 : vector<96x8xf32>
    %cst_5 = arith.constant 0.000000e+00 : f32
    %6 = vector.broadcast %cst_5 : f32 to vector<96x8xf32>
    %7 = arith.maximumf %5, %6 : vector<96x8xf32>
    %8 = arith.truncf %7 : vector<96x8xf32> to vector<96x8xbf16>
    %c0_6 = arith.constant 0 : index
    %c0_7 = arith.constant 0 : index
    %9 = vector.load %arg7[%c0_6, %c0_7] : memref<96x8xbf16, #tpu.memory_space<vmem>>, vector<96x8xbf16>
    tpu.vector_store %arg7[%c0_6, %c0_7], %8 {strides = array<i32>} : memref<96x8xbf16, #tpu.memory_space<vmem>>, vector<96x8xbf16>,
    %c0_8 = arith.constant 0 : index
    %c0_9 = arith.constant 0 : index
    %10 = vector.load %arg5[%c0_8, %c0_9] : memref<4x8xbf16, #tpu.memory_space<vmem>>, vector<4x8xbf16>
    %cst_10 = arith.constant dense<0.000000e+00> : vector<96x8xf32>
    %11 = tpu.matmul %0, %10, %cst_10 {dimension_numbers = #tpu.dot_dimension_numbers<[1], [0], [0], [1], [0, 0, 1, 1], [], []>} : vector<96x4xbf16>, vector<4x8xbf16>, vector<96x8xf32> -> vector<96x8xf32>
    %c0_11 = arith.constant 0 : index
    %c0_12 = arith.constant 0 : index
    %12 = vector.load %arg6[%c0_11, %c0_12] : memref<1x8xf32, #tpu.memory_space<vmem>>, vector<1x8xf32>
    %13 = vector.broadcast %12 : vector<1x8xf32> to vector<96x8xf32>
    %14 = arith.addf %11, %13 : vector<96x8xf32>
    %15 = arith.truncf %14 : vector<96x8xf32> to vector<96x8xbf16>
    %c0_13 = arith.constant 0 : index
    %c0_14 = arith.constant 0 : index
    %16 = vector.load %arg8[%c0_13, %c0_14] : memref<96x8xbf16, #tpu.memory_space<vmem>>, vector<96x8xbf16>
    tpu.vector_store %arg8[%c0_13, %c0_14], %15 {strides = array<i32>} : memref<96x8xbf16, #tpu.memory_space<vmem>>, vector<96x8xbf16>,
    return
  }
  func.func @transform_0(%arg0: i32, %arg1: i32) -> (i32, i32) {
    %c0_i32 = arith.constant 0 : i32
    %c0_i32_0 = arith.constant 0 : i32
    return %arg0, %c0_i32 : i32, i32
  }
  func.func @transform_1(%arg0: i32, %arg1: i32) -> (i32, i32) {
    %c0_i32 = arith.constant 0 : i32
    %c0_i32_0 = arith.constant 0 : i32
    return %c0_i32, %arg1 : i32, i32
  }
  func.func @transform_2(%arg0: i32, %arg1: i32) -> (i32, i32) {
    %c0_i32 = arith.constant 0 : i32
    %c0_i32_0 = arith.constant 0 : i32
    return %c0_i32, %arg1 : i32, i32
  }
  func.func @transform_3(%arg0: i32, %arg1: i32) -> (i32, i32) {
    %c0_i32 = arith.constant 0 : i32
    %c0_i32_0 = arith.constant 0 : i32
    return %c0_i32, %arg1 : i32, i32
  }
  func.func @transform_4(%arg0: i32, %arg1: i32) -> (i32, i32) {
    %c0_i32 = arith.constant 0 : i32
    %c0_i32_0 = arith.constant 0 : i32
    return %c0_i32, %arg1 : i32, i32
  }
  func.func @transform_5(%arg0: i32, %arg1: i32) -> (i32, i32) {
    %c0_i32 = arith.constant 0 : i32
    return %arg0, %arg1 : i32, i32
  }
  func.func @transform_6(%arg0: i32, %arg1: i32) -> (i32, i32) {
    %c0_i32 = arith.constant 0 : i32
    return %arg0, %arg1 : i32, i32
  }
}

</mosaic_0001>

<llo_original>
// kernel: tpu_custom_call.1
$region0: #{tpu_custom_call.1}
  #allocation0 [shape = 'u32[]', space=smem, size = 0x4, offset = 0x4, fixed_abs, tag = 'smem constant byte address 0x4 - core index']
  #allocation1 [shape = 'u32[72,128]{1,0:T(1,128)}', space=vmem, size = 0x9000, scoped, tag = 'internal scratch']
  %s0 = inlined_call_operand.vmem [shape: bf16[192,4], index: 0, kind: input, shape index: {}]
  %s1 = inlined_call_operand.vmem [shape: bf16[4,8], index: 1, kind: input, shape index: {}]
  %s2 = inlined_call_operand.vmem [shape: f32[1,8], index: 2, kind: input, shape index: {}]
  %s3 = inlined_call_operand.vmem [shape: bf16[4,8], index: 3, kind: input, shape index: {}]
  %s4 = inlined_call_operand.vmem [shape: f32[1,8], index: 4, kind: input, shape index: {}]
  %s5 = inlined_call_operand.vmem [shape: bf16[192,8], index: 5, kind: output, shape index: {0}]
  %s6 = inlined_call_operand.vmem [shape: bf16[192,8], index: 6, kind: output, shape index: {1}]
  %7 = xla_tuple %s5, %s6
  %s8 = sld [smem:[#allocation0]]
  $region61: #{tpu_custom_call.1} parent=0
    _
  %s10 = ssub.s32 1, %s8
  %s11 = scalar_select 0, %s10, %s8
  loop: start=0, step=1, limit=4
  $region2: #{tpu_custom_call.1} parent=0 // loop_pre_header
    _
  $region3: #{tpu_custom_call.1} parent=0 // loop_header
    %s13 = sphi 0, %s17
    %p14 = scmp.ge.s32.totalorder %s13, 4
    %s20 = sphi 0, %s32
    %s21 = sphi 0, %s28
    %s22 = sphi 0, %s20
    %s23 = sphi 0, %s21
    %s24 = sphi 0, %s22
    %s25 = sphi 0, %s23
    %s35 = sphi 0, %s37
    %s38 = sphi 0, %s35
    %s39 = sphi 0, %s38
    %s55 = sphi 0, %s39
    %s61 = sphi 0, %s63
    %s64 = sphi 0, %s61
    %s65 = sphi 0, %s64
    %s81 = sphi 0, %s65
    %s87 = sphi 0, %s89
    %s90 = sphi 0, %s87
    %s91 = sphi 0, %s90
    %s107 = sphi 0, %s91
    %s113 = sphi 0, %s115
    %s116 = sphi 0, %s113
    %s117 = sphi 0, %s116
    %s133 = sphi 0, %s117
    %s139 = sphi 0, %s141
    %s142 = sphi 0, %s139
    %s143 = sphi 0, %s142
    %s159 = sphi 0, %s143
    %s167 = sphi 0, %s169
    %s170 = sphi 0, %s167
    %s171 = sphi 0, %s170
    %s187 = sphi 0, %s171
    %s195 = sphi 0, %s197
    %s198 = sphi 0, %s195
    %s199 = sphi 0, %s198
    %s215 = sphi 0, %s199
  $region4: #{tpu_custom_call.1} parent=0 // loop_header_branch
    %16 = sbr.rel (%p14) target = $region8
  $region5: #{tpu_custom_call.1} parent=0 // loop_body
    %s18 = ssub.s32 %s13, 1
    %s19 = ssub.s32 %s13, 2
    %s26 = sadd.s32 1, %s21
    %p27 = scmp.ge.s32.totalorder %s26, 1
    %s28 = scalar_select %p27, 0, %s26
    %s29 = sadd.s32 1, %s20
    %s30 = scalar_select %p27, %s29, %s20
    %p31 = scmp.ge.s32.totalorder %s30, 2
    %s32 = scalar_select %p31, 0, %s30
    %s33 = ssub.s32 %s20, %s32
    %p34 = scmp.eq.s32.totalorder %s33, 0
    %s36 = sadd.s32 %s35, 1
    %s37 = scalar_select %p34, %s35, %s36
    %p40 = pneg %p34
    %p41 = scmp.eq.s32.totalorder %s13, 1
    %p42 = por %p40, %p41
    %p43 = scmp.ne.s32.totalorder %s35, %s38
    %p44 = scmp.eq.s32.totalorder %s13, 0
    %p45 = por %p43, %p44
    %p46 = scmp.ne.s32.totalorder %s35, %s38
    %p47 = scmp.eq.s32.totalorder %s18, 1
    %p48 = por %p46, %p47
    %p49 = scmp.ne.s32.totalorder %s38, %s39
    %p50 = scmp.eq.s32.totalorder %s18, 0
    %p51 = por %p49, %p50
    %p52 = scmp.ne.s32.totalorder %s38, %s39
    %p53 = scmp.eq.s32.totalorder %s19, 1
    %p54 = por %p52, %p53
    %p56 = scmp.ne.s32.totalorder %s39, %s55
    %p57 = scmp.eq.s32.totalorder %s19, 0
    %p58 = por %p56, %p57
    %s59 = ssub.s32 %s21, %s28
    %p60 = scmp.eq.s32.totalorder %s59, 0
    %s62 = sadd.s32 %s61, 1
    %s63 = scalar_select %p60, %s61, %s62
    %p66 = pneg %p60
    %p67 = scmp.eq.s32.totalorder %s13, 1
    %p68 = por %p66, %p67
    %p69 = scmp.ne.s32.totalorder %s61, %s64
    %p70 = scmp.eq.s32.totalorder %s13, 0
    %p71 = por %p69, %p70
    %p72 = scmp.ne.s32.totalorder %s61, %s64
    %p73 = scmp.eq.s32.totalorder %s18, 1
    %p74 = por %p72, %p73
    %p75 = scmp.ne.s32.totalorder %s64, %s65
    %p76 = scmp.eq.s32.totalorder %s18, 0
    %p77 = por %p75, %p76
    %p78 = scmp.ne.s32.totalorder %s64, %s65
    %p79 = scmp.eq.s32.totalorder %s19, 1
    %p80 = por %p78, %p79
    %p82 = scmp.ne.s32.totalorder %s65, %s81
    %p83 = scmp.eq.s32.totalorder %s19, 0
    %p84 = por %p82, %p83
    %s85 = ssub.s32 %s21, %s28
    %p86 = scmp.eq.s32.totalorder %s85, 0
    %s88 = sadd.s32 %s87, 1
    %s89 = scalar_select %p86, %s87, %s88
    %p92 = pneg %p86
    %p93 = scmp.eq.s32.totalorder %s13, 1
    %p94 = por %p92, %p93
    %p95 = scmp.ne.s32.totalorder %s87, %s90
    %p96 = scmp.eq.s32.totalorder %s13, 0
    %p97 = por %p95, %p96
    %p98 = scmp.ne.s32.totalorder %s87, %s90
    %p99 = scmp.eq.s32.totalorder %s18, 1
    %p100 = por %p98, %p99
    %p101 = scmp.ne.s32.totalorder %s90, %s91
    %p102 = scmp.eq.s32.totalorder %s18, 0
    %p103 = por %p101, %p102
    %p104 = scmp.ne.s32.totalorder %s90, %s91
    %p105 = scmp.eq.s32.totalorder %s19, 1
    %p106 = por %p104, %p105
    %p108 = scmp.ne.s32.totalorder %s91, %s107
    %p109 = scmp.eq.s32.totalorder %s19, 0
    %p110 = por %p108, %p109
    %s111 = ssub.s32 %s21, %s28
    %p112 = scmp.eq.s32.totalorder %s111, 0
    %s114 = sadd.s32 %s113, 1
    %s115 = scalar_select %p112, %s113, %s114
    %p118 = pneg %p112
    %p119 = scmp.eq.s32.totalorder %s13, 1
    %p120 = por %p118, %p119
    %p121 = scmp.ne.s32.totalorder %s113, %s116
    %p122 = scmp.eq.s32.totalorder %s13, 0
    %p123 = por %p121, %p122
    %p124 = scmp.ne.s32.totalorder %s113, %s116
    %p125 = scmp.eq.s32.totalorder %s18, 1
    %p126 = por %p124, %p125
    %p127 = scmp.ne.s32.totalorder %s116, %s117
    %p128 = scmp.eq.s32.totalorder %s18, 0
    %p129 = por %p127, %p128
    %p130 = scmp.ne.s32.totalorder %s116, %s117
    %p131 = scmp.eq.s32.totalorder %s19, 1
    %p132 = por %p130, %p131
    %p134 = scmp.ne.s32.totalorder %s117, %s133
    %p135 = scmp.eq.s32.totalorder %s19, 0
    %p136 = por %p134, %p135
    %s137 = ssub.s32 %s21, %s28
    %p138 = scmp.eq.s32.totalorder %s137, 0
    %s140 = sadd.s32 %s139, 1
    %s141 = scalar_select %p138, %s139, %s140
    %p144 = pneg %p138
    %p145 = scmp.eq.s32.totalorder %s13, 1
    %p146 = por %p144, %p145
    %p147 = scmp.ne.s32.totalorder %s139, %s142
    %p148 = scmp.eq.s32.totalorder %s13, 0
    %p149 = por %p147, %p148
    %p150 = scmp.ne.s32.totalorder %s139, %s142
    %p151 = scmp.eq.s32.totalorder %s18, 1
    %p152 = por %p150, %p151
    %p153 = scmp.ne.s32.totalorder %s142, %s143
    %p154 = scmp.eq.s32.totalorder %s18, 0
    %p155 = por %p153, %p154
    %p156 = scmp.ne.s32.totalorder %s142, %s143
    %p157 = scmp.eq.s32.totalorder %s19, 1
    %p158 = por %p156, %p157
    %p160 = scmp.ne.s32.totalorder %s143, %s159
    %p161 = scmp.eq.s32.totalorder %s19, 0
    %p162 = por %p160, %p161
    %s163 = ssub.s32 %s20, %s32
    %s164 = ssub.s32 %s21, %s28
    %s165 = sor.u32 %s163, %s164
    %p166 = scmp.eq.s32.totalorder %s165, 0
    %s168 = sadd.s32 %s167, 1
    %s169 = scalar_select %p166, %s167, %s168
    %p172 = pneg %p166
    %p173 = scmp.eq.s32.totalorder %s13, 1
    %p174 = por %p172, %p173
    %p175 = scmp.ne.s32.totalorder %s167, %s170
    %p176 = scmp.eq.s32.totalorder %s13, 0
    %p177 = por %p175, %p176
    %p178 = scmp.ne.s32.totalorder %s167, %s170
    %p179 = scmp.eq.s32.totalorder %s18, 1
    %p180 = por %p178, %p179
    %p181 = scmp.ne.s32.totalorder %s170, %s171
    %p182 = scmp.eq.s32.totalorder %s18, 0
    %p183 = por %p181, %p182
    %p184 = scmp.ne.s32.totalorder %s170, %s171
    %p185 = scmp.eq.s32.totalorder %s19, 1
    %p186 = por %p184, %p185
    %p188 = scmp.ne.s32.totalorder %s171, %s187
    %p189 = scmp.eq.s32.totalorder %s19, 0
    %p190 = por %p188, %p189
    %s191 = ssub.s32 %s20, %s32
    %s192 = ssub.s32 %s21, %s28
    %s193 = sor.u32 %s191, %s192
    %p194 = scmp.eq.s32.totalorder %s193, 0
    %s196 = sadd.s32 %s195, 1
    %s197 = scalar_select %p194, %s195, %s196
    %p200 = pneg %p194
    %p201 = scmp.eq.s32.totalorder %s13, 1
    %p202 = por %p200, %p201
    %p203 = scmp.ne.s32.totalorder %s195, %s198
    %p204 = scmp.eq.s32.totalorder %s13, 0
    %p205 = por %p203, %p204
    %p206 = scmp.ne.s32.totalorder %s195, %s198
    %p207 = scmp.eq.s32.totalorder %s18, 1
    %p208 = por %p206, %p207
    %p209 = scmp.ne.s32.totalorder %s198, %s199
    %p210 = scmp.eq.s32.totalorder %s18, 0
    %p211 = por %p209, %p210
    %p212 = scmp.ne.s32.totalorder %s198, %s199
    %p213 = scmp.eq.s32.totalorder %s19, 1
    %p214 = por %p212, %p213
    %p216 = scmp.ne.s32.totalorder %s199, %s215
    %p217 = scmp.eq.s32.totalorder %s19, 0
    %p218 = por %p216, %p217
    %p219 = scmp.le.s32.totalorder 1, %s13
    %p220 = scmp.lt.s32.totalorder %s13, 3
    %p221 = pnand %p219, %p220
    %p222 = pneg %p221
    // Predicated region
    $region9: #{tpu_custom_call.1} parent=5 // pred_check
      _
    $region10: #{tpu_custom_call.1} parent=5 // pred_check_branch
      %224 = sbr.rel (%p221) target = $region12
    $region11: #{tpu_custom_call.1} parent=5 // pred_region
      %s225 = ssub.s32 %s13, 1
      // Predicated region
      $region13: #{tpu_custom_call.1} parent=11 // pred_check
        %p226 = pneg %p77
      $region14: #{tpu_custom_call.1} parent=11 // pred_check_branch
        %228 = sbr.rel (%p226) target = $region16
      $region15: #{tpu_custom_call.1} parent=11 // pred_region
        %p229 = scmp.lt.s32.totalorder %s23, 0
        %s230 = scalar_select %p229, %s23, 0
        %s231 = smul.addr %s230, 2
        %s232 = scalar_lea.vmem %s1, %s231
      $region16: #{tpu_custom_call.1} parent=11 // pred_fallthru
        _
      // Predicated region
      $region17: #{tpu_custom_call.1} parent=11 // pred_check
        %p233 = pneg %p103
      $region18: #{tpu_custom_call.1} parent=11 // pred_check_branch
        %235 = sbr.rel (%p233) target = $region20
      $region19: #{tpu_custom_call.1} parent=11 // pred_region
        %p236 = scmp.lt.s32.totalorder %s23, 0
        %s237 = scalar_select %p236, %s23, 0
        %s238 = scalar_lea.vmem %s2, %s237
      $region20: #{tpu_custom_call.1} parent=11 // pred_fallthru
        _
      // Predicated region
      $region21: #{tpu_custom_call.1} parent=11 // pred_check
        %p239 = pneg %p129
      $region22: #{tpu_custom_call.1} parent=11 // pred_check_branch
        %241 = sbr.rel (%p239) target = $region24
      $region23: #{tpu_custom_call.1} parent=11 // pred_region
        %p242 = scmp.lt.s32.totalorder %s23, 0
        %s243 = scalar_select %p242, %s23, 0
        %s244 = smul.addr %s243, 2
        %s245 = scalar_lea.vmem %s3, %s244
      $region24: #{tpu_custom_call.1} parent=11 // pred_fallthru
        _
      // Predicated region
      $region25: #{tpu_custom_call.1} parent=11 // pred_check
        %p246 = pneg %p155
      $region26: #{tpu_custom_call.1} parent=11 // pred_check_branch
        %248 = sbr.rel (%p246) target = $region28
      $region27: #{tpu_custom_call.1} parent=11 // pred_region
        %p249 = scmp.lt.s32.totalorder %s23, 0
        %s250 = scalar_select %p249, %s23, 0
        %s251 = scalar_lea.vmem %s4, %s250
      $region28: #{tpu_custom_call.1} parent=11 // pred_fallthru
        _
    $region12: #{tpu_custom_call.1} parent=5 // pred_fallthru
      _
    %p252 = scmp.lt.s32.totalorder %s13, 2
    // Predicated region
    $region29: #{tpu_custom_call.1} parent=5 // pred_check
      %p253 = pneg %p252
    $region30: #{tpu_custom_call.1} parent=5 // pred_check_branch
      %255 = sbr.rel (%p253) target = $region32
    $region31: #{tpu_custom_call.1} parent=5 // pred_region
      // Predicated region
      $region33: #{tpu_custom_call.1} parent=31 // pred_check
        %p256 = pneg %p45
      $region34: #{tpu_custom_call.1} parent=31 // pred_check_branch
        %258 = sbr.rel (%p256) target = $region36
      $region35: #{tpu_custom_call.1} parent=31 // pred_region
        %s259 = smul.u32 12, %s20
        %p260 = scmp.lt.s32.totalorder %s259, 23
        %s261 = scalar_select %p260, %s259, 23
        %s262 = smul.addr %s261, 4
        %s263 = scalar_lea.vmem %s0, %s262
        %s264 = smul.u32 12, %s20
      $region36: #{tpu_custom_call.1} parent=31 // pred_fallthru
        _
    $region32: #{tpu_custom_call.1} parent=5 // pred_fallthru
      _
    %p265 = scmp.le.s32.totalorder 1, %s13
    %p266 = scmp.lt.s32.totalorder %s13, 3
    %p267 = pnand %p265, %p266
    %p268 = pneg %p267
    // Predicated region
    $region37: #{tpu_custom_call.1} parent=5 // pred_check
      _
    $region38: #{tpu_custom_call.1} parent=5 // pred_check_branch
      %270 = sbr.rel (%p267) target = $region40
    $region39: #{tpu_custom_call.1} parent=5 // pred_region
      %s271 = ssub.s32 %s13, 1
      %s272 = smul.u32 12, %s22
      %p273 = scmp.lt.s32.totalorder %s272, 23
      %s274 = scalar_select %p273, %s272, 23
      %s275 = smul.addr %s274, 4
      %s276 = scalar_lea.vmem %s0, %s275
      %p277 = pneg %p51
      %p278 = pneg %p48
      %p279 = scmp.lt.s32.totalorder %s23, 0
      %s280 = scalar_select %p279, %s23, 0
      %s281 = smul.addr %s280, 2
      %s282 = scalar_lea.vmem %s1, %s281
      %p283 = pneg %p77
      %p284 = pneg %p74
      %p285 = scmp.lt.s32.totalorder %s23, 0
      %s286 = scalar_select %p285, %s23, 0
      %s287 = scalar_lea.vmem %s2, %s286
      %p288 = pneg %p103
      %p289 = pneg %p100
      %p290 = scmp.lt.s32.totalorder %s23, 0
      %s291 = scalar_select %p290, %s23, 0
      %s292 = smul.addr %s291, 2
      %s293 = scalar_lea.vmem %s3, %s292
      %p294 = pneg %p129
      %p295 = pneg %p126
      %p296 = scmp.lt.s32.totalorder %s23, 0
      %s297 = scalar_select %p296, %s23, 0
      %s298 = scalar_lea.vmem %s4, %s297
      %p299 = pneg %p155
      %p300 = pneg %p152
      %p301 = pneg %p183
      %p302 = pneg %p180
      %s303 = smul.u32 12, %s22
      %p304 = scmp.lt.s32.totalorder %s303, 23
      %s305 = scalar_select %p304, %s303, 23
      %p306 = scmp.lt.s32.totalorder %s23, 0
      %s307 = scalar_select %p306, %s23, 0
      %s308 = sadd.s32 %s307, %s305
      %s309 = smul.addr %s308, 4
      %s310 = scalar_lea.vmem %s5, %s309
      %p311 = pneg %p211
      %p312 = pneg %p208
      %s313 = smul.u32 12, %s22
      %p314 = scmp.lt.s32.totalorder %s313, 23
      %s315 = scalar_select %p314, %s313, 23
      %p316 = scmp.lt.s32.totalorder %s23, 0
      %s317 = scalar_select %p316, %s23, 0
      %s318 = sadd.s32 %s317, %s315
      %s319 = smul.addr %s318, 4
      %s320 = scalar_lea.vmem %s6, %s319
      %s321 = smul.u32 12, %s22
      %p322 = scmp.lt.s32.totalorder %s321, 23
      %s323 = scalar_select %p322, %s321, 23
      %s324 = smul.addr %s323, 4
      %s325 = scalar_lea.vmem %s0, %s324
      %s326 = smul.u32 12, %s22
      %p327 = scmp.lt.s32.totalorder %s23, 0
      %s328 = scalar_select %p327, %s23, 0
      %s329 = smul.addr %s328, 2
      %s330 = scalar_lea.vmem %s1, %s329
      %p331 = scmp.lt.s32.totalorder %s23, 0
      %s332 = scalar_select %p331, %s23, 0
      %s333 = scalar_lea.vmem %s2, %s332
      %p334 = scmp.lt.s32.totalorder %s23, 0
      %s335 = scalar_select %p334, %s23, 0
      %s336 = smul.addr %s335, 2
      %s337 = scalar_lea.vmem %s3, %s336
      %p338 = scmp.lt.s32.totalorder %s23, 0
      %s339 = scalar_select %p338, %s23, 0
      %s340 = scalar_lea.vmem %s4, %s339
      %s341 = smul.u32 12, %s22
      %p342 = scmp.lt.s32.totalorder %s341, 23
      %s343 = scalar_select %p342, %s341, 23
      %p344 = scmp.lt.s32.totalorder %s23, 0
      %s345 = scalar_select %p344, %s23, 0
      %s346 = sadd.s32 %s345, %s343
      %s347 = smul.addr %s346, 4
      %s348 = scalar_lea.vmem %s5, %s347
      %s349 = smul.u32 12, %s22
      %s350 = smul.u32 12, %s22
      %p351 = scmp.lt.s32.totalorder %s350, 23
      %s352 = scalar_select %p351, %s350, 23
      %p353 = scmp.lt.s32.totalorder %s23, 0
      %s354 = scalar_select %p353, %s23, 0
      %s355 = sadd.s32 %s354, %s352
      %s356 = smul.addr %s355, 4
      %s357 = scalar_lea.vmem %s6, %s356
      %s358 = smul.u32 12, %s22
      %v360 = vld [vmem:[%s325] sm:$0xf]
      %v361 = vld [vmem:[%s325 + $0x4] sm:$0xf]
      %v362 = vld [vmem:[%s325 + $0x8] sm:$0xf]
      %v363 = vld [vmem:[%s325 + $0xc] sm:$0xf]
      %v364 = vld [vmem:[%s325 + $0x10] sm:$0xf]
      %v365 = vld [vmem:[%s325 + $0x14] sm:$0xf]
      %v366 = vld [vmem:[%s325 + $0x18] sm:$0xf]
      %v367 = vld [vmem:[%s325 + $0x1c] sm:$0xf]
      %v368 = vld [vmem:[%s325 + $0x20] sm:$0xf]
      %v369 = vld [vmem:[%s325 + $0x24] sm:$0xf]
      %v370 = vld [vmem:[%s325 + $0x28] sm:$0xf]
      %v371 = vld [vmem:[%s325 + $0x2c] sm:$0xf]
      %v372 = vld [vmem:[%s330] sm:$0x3]
      %v373 = vld [vmem:[%s333] sm:$0x1]
      %v375 = vperm.slane %v373, 0
      %v389 = vunpack.c.l.b16 %v360
      %v390 = vunpack.c.l.b16 %v361
      %v391 = vunpack.c.l.b16 %v362
      %v392 = vunpack.c.l.b16 %v363
      %v393 = vunpack.c.l.b16 %v364
      %v394 = vunpack.c.l.b16 %v365
      %v395 = vunpack.c.l.b16 %v366
      %v396 = vunpack.c.l.b16 %v367
      %v397 = vunpack.c.l.b16 %v368
      %v398 = vunpack.c.l.b16 %v369
      %v399 = vunpack.c.l.b16 %v370
      %v400 = vunpack.c.l.b16 %v371
      %v401 = vpack.c.b16 %v390, %v389
      %v402 = vpack.c.b16 %v392, %v391
      %v403 = vpack.c.b16 %v394, %v393
      %v404 = vpack.c.b16 %v396, %v395
      %v405 = vpack.c.b16 %v398, %v397
      %v406 = vpack.c.b16 %v400, %v399
      %vm407 = vcmask 31744
      %v409 = vsel %vm407, %v401, 0
      %v412 = vsel %vm407, %v402, 0
      %v415 = vsel %vm407, %v403, 0
      %v418 = vsel %vm407, %v404, 0
      %v421 = vsel %vm407, %v405, 0
      %v424 = vsel %vm407, %v406, 0
      %vm426 = vcmask 1041408
      %v428 = vsel %vm426, %v372, 0
      %430 = vmatpush.bf16.msra.mxu0 0
      %431 = vmatpush.bf16.msra.mxu0 0
      %432 = vmatpush.bf16.msra.mxu0 0
      %433 = vmatpush.bf16.msra.mxu0 0
      %434 = vmatpush.bf16.msra.mxu0 0
      %435 = vmatpush.bf16.msra.mxu0 0
      %436 = vmatpush.bf16.msra.mxu0 0
      %437 = vmatpush.bf16.msra.mxu0 %v428
      %438 = vmatmul.bf16.gmra.mxu0 %v409
      %v439 = vpop.f32.mrf.mxu0
      %v440 = vadd.f32 %v375, %v439
      %v441 = vpop.f32.mrf.mxu0
      %v442 = vadd.f32 %v375, %v441
      %443 = vmatmul.bf16.gmra.mxu0 %v412
      %v444 = vpop.f32.mrf.mxu0
      %v445 = vadd.f32 %v375, %v444
      %v446 = vpop.f32.mrf.mxu0
      %v447 = vadd.f32 %v375, %v446
      %448 = vmatmul.bf16.gmra.mxu0 %v415
      %v449 = vpop.f32.mrf.mxu0
      %v450 = vadd.f32 %v375, %v449
      %v451 = vpop.f32.mrf.mxu0
      %v452 = vadd.f32 %v375, %v451
      %453 = vmatmul.bf16.gmra.mxu0 %v418
      %v454 = vpop.f32.mrf.mxu0
      %v455 = vadd.f32 %v375, %v454
      %v456 = vpop.f32.mrf.mxu0
      %v457 = vadd.f32 %v375, %v456
      %458 = vmatmul.bf16.gmra.mxu0 %v421
      %v459 = vpop.f32.mrf.mxu0
      %v460 = vadd.f32 %v375, %v459
      %v461 = vpop.f32.mrf.mxu0
      %v462 = vadd.f32 %v375, %v461
      %463 = vmatmul.bf16.gmra.mxu0 %v424
      %v464 = vpop.f32.mrf.mxu0
      %v465 = vadd.f32 %v375, %v464
      %v466 = vpop.f32.mrf.mxu0
      %v467 = vadd.f32 %v375, %v466
      %468 = vdwg.mxu0
      %v469 = vmax.f32 %v440, 0.0
      %v470 = vmax.f32 %v442, 0.0
      %v471 = vmax.f32 %v445, 0.0
      %v472 = vmax.f32 %v447, 0.0
      %v473 = vmax.f32 %v450, 0.0
      %v474 = vmax.f32 %v452, 0.0
      %v475 = vmax.f32 %v455, 0.0
      %v476 = vmax.f32 %v457, 0.0
      %v477 = vmax.f32 %v460, 0.0
      %v478 = vmax.f32 %v462, 0.0
      %v479 = vmax.f32 %v465, 0.0
      %v480 = vmax.f32 %v467, 0.0
      %v481 = vpack.c.bf16 %v469, %v469
      %v482 = vpack.c.bf16 %v470, %v470
      %v483 = vpack.c.bf16 %v471, %v471
      %v484 = vpack.c.bf16 %v472, %v472
      %v485 = vpack.c.bf16 %v473, %v473
      %v486 = vpack.c.bf16 %v474, %v474
      %v487 = vpack.c.bf16 %v475, %v475
      %v488 = vpack.c.bf16 %v476, %v476
      %v489 = vpack.c.bf16 %v477, %v477
      %v490 = vpack.c.bf16 %v478, %v478
      %v491 = vpack.c.bf16 %v479, %v479
      %v492 = vpack.c.bf16 %v480, %v480
      %vm493 = vcmask 60416
      %494 = vst.msk [vmem:[%s348] sm:$0xf] %vm493, %v481
      %495 = vst.msk [vmem:[%s348 + $0x4] sm:$0xf] %vm493, %v482
      %496 = vst.msk [vmem:[%s348 + $0x8] sm:$0xf] %vm493, %v483
      %497 = vst.msk [vmem:[%s348 + $0xc] sm:$0xf] %vm493, %v484
      %498 = vst.msk [vmem:[%s348 + $0x10] sm:$0xf] %vm493, %v485
      %499 = vst.msk [vmem:[%s348 + $0x14] sm:$0xf] %vm493, %v486
      %500 = vst.msk [vmem:[%s348 + $0x18] sm:$0xf] %vm493, %v487
      %501 = vst.msk [vmem:[%s348 + $0x1c] sm:$0xf] %vm493, %v488
      %502 = vst.msk [vmem:[%s348 + $0x20] sm:$0xf] %vm493, %v489
      %503 = vst.msk [vmem:[%s348 + $0x24] sm:$0xf] %vm493, %v490
      %504 = vst.msk [vmem:[%s348 + $0x28] sm:$0xf] %vm493, %v491
      %505 = vst.msk [vmem:[%s348 + $0x2c] sm:$0xf] %vm493, %v492
      %v506 = vld [vmem:[%s337] sm:$0x3]
      %v507 = vld [vmem:[%s340] sm:$0x1]
      %v509 = vperm.slane %v507, 0
      %v512 = vsel %vm426, %v506, 0
      %514 = vmatpush.bf16.msra.mxu0 0
      %515 = vmatpush.bf16.msra.mxu0 0
      %516 = vmatpush.bf16.msra.mxu0 0
      %517 = vmatpush.bf16.msra.mxu0 0
      %518 = vmatpush.bf16.msra.mxu0 0
      %519 = vmatpush.bf16.msra.mxu0 0
      %520 = vmatpush.bf16.msra.mxu0 0
      %521 = vmatpush.bf16.msra.mxu0 %v512
      %522 = vmatmul.bf16.gmra.mxu0 %v409
      %v523 = vpop.f32.mrf.mxu0
      %v524 = vadd.f32 %v509, %v523
      %v525 = vpop.f32.mrf.mxu0
      %v526 = vadd.f32 %v509, %v525
      %527 = vmatmul.bf16.gmra.mxu0 %v412
      %v528 = vpop.f32.mrf.mxu0
      %v529 = vadd.f32 %v509, %v528
      %v530 = vpop.f32.mrf.mxu0
      %v531 = vadd.f32 %v509, %v530
      %532 = vmatmul.bf16.gmra.mxu0 %v415
      %v533 = vpop.f32.mrf.mxu0
      %v534 = vadd.f32 %v509, %v533
      %v535 = vpop.f32.mrf.mxu0
      %v536 = vadd.f32 %v509, %v535
      %537 = vmatmul.bf16.gmra.mxu0 %v418
      %v538 = vpop.f32.mrf.mxu0
      %v539 = vadd.f32 %v509, %v538
      %v540 = vpop.f32.mrf.mxu0
      %v541 = vadd.f32 %v509, %v540
      %542 = vmatmul.bf16.gmra.mxu0 %v421
      %v543 = vpop.f32.mrf.mxu0
      %v544 = vadd.f32 %v509, %v543
      %v545 = vpop.f32.mrf.mxu0
      %v546 = vadd.f32 %v509, %v545
      %547 = vmatmul.bf16.gmra.mxu0 %v424
      %v548 = vpop.f32.mrf.mxu0
      %v549 = vadd.f32 %v509, %v548
      %v550 = vpop.f32.mrf.mxu0
      %v551 = vadd.f32 %v509, %v550
      %552 = vdwg.mxu0
      %v553 = vpack.c.bf16 %v524, %v524
      %v554 = vpack.c.bf16 %v526, %v526
      %v555 = vpack.c.bf16 %v529, %v529
      %v556 = vpack.c.bf16 %v531, %v531
      %v557 = vpack.c.bf16 %v534, %v534
      %v558 = vpack.c.bf16 %v536, %v536
      %v559 = vpack.c.bf16 %v539, %v539
      %v560 = vpack.c.bf16 %v541, %v541
      %v561 = vpack.c.bf16 %v544, %v544
      %v562 = vpack.c.bf16 %v546, %v546
      %v563 = vpack.c.bf16 %v549, %v549
      %v564 = vpack.c.bf16 %v551, %v551
      %565 = vst.msk [vmem:[%s357] sm:$0xf] %vm493, %v553
      %566 = vst.msk [vmem:[%s357 + $0x4] sm:$0xf] %vm493, %v554
      %567 = vst.msk [vmem:[%s357 + $0x8] sm:$0xf] %vm493, %v555
      %568 = vst.msk [vmem:[%s357 + $0xc] sm:$0xf] %vm493, %v556
      %569 = vst.msk [vmem:[%s357 + $0x10] sm:$0xf] %vm493, %v557
      %570 = vst.msk [vmem:[%s357 + $0x14] sm:$0xf] %vm493, %v558
      %571 = vst.msk [vmem:[%s357 + $0x18] sm:$0xf] %vm493, %v559
      %572 = vst.msk [vmem:[%s357 + $0x1c] sm:$0xf] %vm493, %v560
      %573 = vst.msk [vmem:[%s357 + $0x20] sm:$0xf] %vm493, %v561
      %574 = vst.msk [vmem:[%s357 + $0x24] sm:$0xf] %vm493, %v562
      %575 = vst.msk [vmem:[%s357 + $0x28] sm:$0xf] %vm493, %v563
      %576 = vst.msk [vmem:[%s357 + $0x2c] sm:$0xf] %vm493, %v564
      %s577 = smul.u32 12, %s22
      %p578 = scmp.lt.s32.totalorder %s577, 23
      %s579 = scalar_select %p578, %s577, 23
      %p580 = scmp.lt.s32.totalorder %s23, 0
      %s581 = scalar_select %p580, %s23, 0
      %s582 = sadd.s32 %s581, %s579
      %s583 = smul.addr %s582, 4
      %s584 = scalar_lea.vmem %s5, %s583
      %s585 = smul.u32 12, %s22
      %p586 = scmp.lt.s32.totalorder %s585, 23
      %s587 = scalar_select %p586, %s585, 23
      %p588 = scmp.lt.s32.totalorder %s23, 0
      %s589 = scalar_select %p588, %s23, 0
      %s590 = sadd.s32 %s589, %s587
      %s591 = smul.addr %s590, 4
      %s592 = scalar_lea.vmem %s6, %s591
      // Predicated region
      $region41: #{tpu_custom_call.1} parent=39 // pred_check
        %p593 = pneg %p180
      $region42: #{tpu_custom_call.1} parent=39 // pred_check_branch
        %595 = sbr.rel (%p593) target = $region44
      $region43: #{tpu_custom_call.1} parent=39 // pred_region
        %s596 = smul.u32 12, %s22
      $region44: #{tpu_custom_call.1} parent=39 // pred_fallthru
        _
      // Predicated region
      $region45: #{tpu_custom_call.1} parent=39 // pred_check
        %p597 = pneg %p208
      $region46: #{tpu_custom_call.1} parent=39 // pred_check_branch
        %599 = sbr.rel (%p597) target = $region48
      $region47: #{tpu_custom_call.1} parent=39 // pred_region
        %s600 = smul.u32 12, %s22
      $region48: #{tpu_custom_call.1} parent=39 // pred_fallthru
        _
    $region40: #{tpu_custom_call.1} parent=5 // pred_fallthru
      _
    %p601 = scmp.le.s32.totalorder 2, %s13
    // Predicated region
    $region49: #{tpu_custom_call.1} parent=5 // pred_check
      %p602 = pneg %p601
    $region50: #{tpu_custom_call.1} parent=5 // pred_check_branch
      %604 = sbr.rel (%p602) target = $region52
    $region51: #{tpu_custom_call.1} parent=5 // pred_region
      %s605 = ssub.s32 %s13, 2
      // Predicated region
      $region53: #{tpu_custom_call.1} parent=51 // pred_check
        %p606 = pneg %p186
      $region54: #{tpu_custom_call.1} parent=51 // pred_check_branch
        %608 = sbr.rel (%p606) target = $region56
      $region55: #{tpu_custom_call.1} parent=51 // pred_region
        %s609 = smul.u32 12, %s24
        %p610 = scmp.lt.s32.totalorder %s609, 23
        %s611 = scalar_select %p610, %s609, 23
        %p612 = scmp.lt.s32.totalorder %s25, 0
        %s613 = scalar_select %p612, %s25, 0
        %s614 = sadd.s32 %s613, %s611
        %s615 = smul.addr %s614, 4
        %s616 = scalar_lea.vmem %s5, %s615
      $region56: #{tpu_custom_call.1} parent=51 // pred_fallthru
        _
      // Predicated region
      $region57: #{tpu_custom_call.1} parent=51 // pred_check
        %p617 = pneg %p214
      $region58: #{tpu_custom_call.1} parent=51 // pred_check_branch
        %619 = sbr.rel (%p617) target = $region60
      $region59: #{tpu_custom_call.1} parent=51 // pred_region
        %s620 = smul.u32 12, %s24
        %p621 = scmp.lt.s32.totalorder %s620, 23
        %s622 = scalar_select %p621, %s620, 23
        %p623 = scmp.lt.s32.totalorder %s25, 0
        %s624 = scalar_select %p623, %s25, 0
        %s625 = sadd.s32 %s624, %s622
        %s626 = smul.addr %s625, 4
        %s627 = scalar_lea.vmem %s6, %s626
      $region60: #{tpu_custom_call.1} parent=51 // pred_fallthru
        _
    $region52: #{tpu_custom_call.1} parent=5 // pred_fallthru
      _
  $region6: #{tpu_custom_call.1} parent=0 // loop_footer
    %s17 = sadd.s32 1, %s13
  $region7: #{tpu_custom_call.1} parent=0 // loop_footer_branch
    %12 = sbr.rel target = $region3
  $region8: #{tpu_custom_call.1} parent=0 // loop_exit
    _

</llo_original>
